<compile_context>
chip_gen: v7x
topology: tpu7x:2x2x1
jax: 0.10.0
libtpu: 0.0.40
codegen_flags: <defaults>
</compile_context>

<pallas_src>
import jax
import jax.numpy as jnp
from jax.experimental import pallas as pl
from jax.experimental.pallas import tpu as pltpu


def _round_up(x, m):
    return ((x + m - 1) // m) * m


# --------------------------------------------------------------------------
# Kernel
# --------------------------------------------------------------------------
def _make_actor_kernel(h_pad, a_pad, bf16_epilogue):
    """h_pad / a_pad are static lane-padded hidden / action widths."""

    def kernel(scale_ref,          # (1, 1) f32 in SMEM
               x_ref,              # (TM, S)  f32   (state, unpadded lanes)
               w1_ref,             # (S, H_pad)     bf16
               wmid_ref,           # (3, H_pad, H_pad) bf16  (l2, l3, l4)
               w5_ref,             # (H_pad, A_pad) bf16
               b_ref,              # (5, P) f32     (rows b1..b5, zero-padded)
               out_ref):           # (TM, A_pad)    bf16
        # In-kernel downcast of the streamed f32 state (saves a wrapper pass).
        x = x_ref[...].astype(jnp.bfloat16)

        def epilogue(acc_f32, bias_row):
            # bias-add + ReLU; returns bf16 activations for the next MXU pass.
            if bf16_epilogue:
                # v6e/v7x: native bf16 VALU -> half the vector work / vregs.
                return jnp.maximum(acc_f32.astype(jnp.bfloat16)
                                   + bias_row.astype(jnp.bfloat16), 0)
            # v5e: keep the epilogue in f32, single downcast at the end.
            return jnp.maximum(acc_f32 + bias_row, 0.0).astype(jnp.bfloat16)

        # layer 1: MXU in bf16, accumulate in f32.
        acc = jnp.dot(x, w1_ref[...], preferred_element_type=jnp.float32)
        a = epilogue(acc, b_ref[0:1, 0:h_pad])

        # layers 2..4 (stacked weights, statically unrolled).
        for k in range(3):
            acc = jnp.dot(a, wmid_ref[k], preferred_element_type=jnp.float32)
            a = epilogue(acc, b_ref[k + 1:k + 2, 0:h_pad])

        # layer 5 + tanh epilogue in f32 (EUP), lane-dense bf16 store.
        acc = jnp.dot(a, w5_ref[...], preferred_element_type=jnp.float32)
        acc = acc + b_ref[4:5, 0:a_pad]
        out_ref[...] = (scale_ref[0, 0] * jnp.tanh(acc)).astype(out_ref.dtype)

    return kernel


# --------------------------------------------------------------------------
# Parameter packing: lane-pad H/A, cast weights to bf16, stack tensors.
# (S axis of w1 is left unpadded so the state needs no wrapper-side pad.)
# --------------------------------------------------------------------------
def pack_actor_params(params, *, lane_align=128):
    # lane_align=256 can help MXU utilization on v6e/v7x when hidden_size>=256;
    # keep 128 for small hidden sizes (no benefit on v5e's 128x128 MXU).
    w1, w2, w3, w4, w5 = (params[f"w{i}"] for i in range(1, 6))
    b1, b2, b3, b4, b5 = (params[f"b{i}"] for i in range(1, 6))

    S, H = w1.shape
    A = w5.shape[1]
    H_pad = _round_up(H, lane_align)
    A_pad = _round_up(A, lane_align)
    P = max(H_pad, A_pad)

    def pad_w(w, r, c):
        return jnp.pad(w, ((0, r - w.shape[0]), (0, c - w.shape[1]))
                       ).astype(jnp.bfloat16)

    def pad_b(b, c):
        b = jnp.reshape(b, (1, -1)).astype(jnp.float32)
        return jnp.pad(b, ((0, 0), (0, c - b.shape[1])))

    packed = {
        "w1": pad_w(w1, S, H_pad),                      # (S, H_pad)
        "w_mid": jnp.stack([pad_w(w, H_pad, H_pad) for w in (w2, w3, w4)], 0),
        "w5": pad_w(w5, H_pad, A_pad),
        "b_all": jnp.concatenate(
            [pad_b(b1, P), pad_b(b2, P), pad_b(b3, P), pad_b(b4, P),
             pad_b(b5, P)], axis=0),
    }
    dims = dict(S=S, H=H, A=A, H_pad=H_pad, A_pad=A_pad, P=P)
    return packed, dims


# --------------------------------------------------------------------------
# Forward wrapper
# --------------------------------------------------------------------------
def actor_forward(state, packed, dims, max_action, *, block_b=2048,
                  bf16_epilogue=True, unpad=True):
    """state: (B, state_dim) f32.  packed/dims: from pack_actor_params.

    bf16_epilogue: keep True on v6e/v7x; set False on v5e (no bf16 VPU path).
    unpad: if False, return the padded (B_pad, A_pad) bf16 slab (skips the
           output-slice HBM pass for consumers that can handle padding).
    """
    B, S = state.shape
    assert S == dims["S"], (S, dims["S"])
    H_pad, A_pad, P, A = dims["H_pad"], dims["A_pad"], dims["P"], dims["A"]

    # Balanced grid: nb steps of TM rows (TM multiple of 16 for bf16 tiles),
    # minimal padded-row waste, and at most ~block_b rows per step.
    nb = pl.cdiv(B, block_b)
    TM = _round_up(pl.cdiv(B, nb), 16)
    B_pad = nb * TM
    x = state if B_pad == B else jnp.pad(state, ((0, B_pad - B), (0, 0)))

    scale = jnp.asarray(max_action, jnp.float32).reshape(1, 1)

    # Explicit VMEM budget: double-buffered x/out tiles + resident weights.
    bytes_weights = 2 * (packed["w1"].size + packed["w_mid"].size
                         + packed["w5"].size) + 4 * packed["b_all"].size
    bytes_stream = 2 * (TM * S * 4 + TM * A_pad * 2)     # x f32, out bf16
    vmem_limit = max(32 * 1024 * 1024,
                     int(1.5 * (2 * bytes_weights + bytes_stream)))

    out = pl.pallas_call(
        _make_actor_kernel(H_pad, A_pad, bf16_epilogue),
        out_shape=jax.ShapeDtypeStruct((B_pad, A_pad), jnp.bfloat16),
        grid=(nb,),
        in_specs=[
            # max_action scalar lives in SMEM (no recompile per value).
            pl.BlockSpec(memory_space=pltpu.MemorySpace.SMEM),
            # state: tiled over the batch grid axis, read as f32.
            pl.BlockSpec((TM, S), lambda i: (i, 0)),
            # weights / biases: constant block index -> VMEM-resident across
            # all grid steps (DMA'd once).
            pl.BlockSpec((S, H_pad), lambda i: (0, 0)),
            pl.BlockSpec((3, H_pad, H_pad), lambda i: (0, 0, 0)),
            pl.BlockSpec((H_pad, A_pad), lambda i: (0, 0)),
            pl.BlockSpec((5, P), lambda i: (0, 0)),
        ],
        out_specs=pl.BlockSpec((TM, A_pad), lambda i: (i, 0)),
        compiler_params=pltpu.CompilerParams(
            dimension_semantics=("parallel",),     # shards batch on v7x's TCs
            vmem_limit_bytes=vmem_limit),
    )(scale, x, packed["w1"], packed["w_mid"], packed["w5"], packed["b_all"])

    if unpad:
        return out[:B, :A]
    return out


# --------------------------------------------------------------------------
# Init + pure-JAX reference (f32, matches PyTorch semantics)
# --------------------------------------------------------------------------
def init_actor_params(key, state_dim, action_dim, hidden_size):
    """nn.Linear-style init; weights stored transposed as (in, out)."""
    layer_dims = [
        ("1", state_dim, hidden_size),
        ("2", hidden_size, hidden_size),
        ("3", hidden_size, hidden_size),
        ("4", hidden_size, hidden_size),
        ("5", hidden_size, action_dim),
    ]
    params = {}
    for name, fan_in, fan_out in layer_dims:
        key, kw, kb = jax.random.split(key, 3)
        bound = 1.0 / jnp.sqrt(jnp.float32(fan_in))
        params[f"w{name}"] = jax.random.uniform(
            kw, (fan_in, fan_out), jnp.float32, -bound, bound)
        params[f"b{name}"] = jax.random.uniform(
            kb, (1, fan_out), jnp.float32, -bound, bound)
    return params


def actor_forward_ref(state, params, max_action):
    a = jnp.maximum(state @ params["w1"] + params["b1"], 0.0)
    a = jnp.maximum(a @ params["w2"] + params["b2"], 0.0)
    a = jnp.maximum(a @ params["w3"] + params["b3"], 0.0)
    a = jnp.maximum(a @ params["w4"] + params["b4"], 0.0)
    return max_action * jnp.tanh(a @ params["w5"] + params["b5"])


if __name__ == "__main__":
    key = jax.random.PRNGKey(0)

    batch = 2
    state_dim = 16
    action_dim = 4
    hidden_size = 32
    max_action = 1.0

    key, k_state = jax.random.split(key)
    state = jax.random.normal(k_state, (batch, state_dim), jnp.float32)

    params = init_actor_params(key, state_dim, action_dim, hidden_size)
    packed, dims = pack_actor_params(params)

    out = actor_forward(state, packed, dims, max_action)
    out = jax.block_until_ready(out)

    ref = actor_forward_ref(state, params, max_action)
    assert out.shape == (batch, action_dim), out.shape
    assert out.dtype == jnp.bfloat16, out.dtype
    # Matmuls and the output run in bf16 (f32 accumulation); outputs are
    # tanh-bounded, so a loose tolerance vs. the f32 reference holds.
    assert jnp.allclose(out.astype(jnp.float32), ref, atol=5e-2, rtol=5e-2), \
        "mismatch vs reference"

    print("KERNEL_OK")
</pallas_src>

<mosaic_0001>
module attributes {stable_mosaic.version = 11 : i64} {
  func.func @kernel(%arg0: i32, %arg1: memref<1x1xf32, #tpu.memory_space<smem>>, %arg2: memref<16x16xf32, #tpu.memory_space<vmem>>, %arg3: memref<16x128xbf16, #tpu.memory_space<vmem>>, %arg4: memref<3x128x128xbf16, #tpu.memory_space<vmem>>, %arg5: memref<128x128xbf16, #tpu.memory_space<vmem>>, %arg6: memref<5x128xf32, #tpu.memory_space<vmem>>, %arg7: memref<16x128xbf16, #tpu.memory_space<vmem>>) attributes {dimension_semantics = [#tpu.dimension_semantics<parallel>], iteration_bounds = array<i64: 1>, scalar_prefetch = 0 : i64, scratch_operands = 0 : i64, tpu.core_type = #tpu.core_type<tc>, window_params = [{transform_indices = @transform_0, window_bounds = array<i64: 1, 1>}, {transform_indices = @transform_1, window_bounds = array<i64: 16, 16>}, {pipeline_mode = #tpu.pipeline_mode<synchronous>, transform_indices = @transform_2, window_bounds = array<i64: 16, 128>}, {pipeline_mode = #tpu.pipeline_mode<synchronous>, transform_indices = @transform_3, window_bounds = array<i64: 3, 128, 128>}, {pipeline_mode = #tpu.pipeline_mode<synchronous>, transform_indices = @transform_4, window_bounds = array<i64: 128, 128>}, {pipeline_mode = #tpu.pipeline_mode<synchronous>, transform_indices = @transform_5, window_bounds = array<i64: 5, 128>}, {transform_indices = @transform_6, window_bounds = array<i64: 16, 128>}]} {
    %c0 = arith.constant 0 : index
    %c0_0 = arith.constant 0 : index
    %0 = vector.load %arg2[%c0, %c0_0] : memref<16x16xf32, #tpu.memory_space<vmem>>, vector<16x16xf32>
    %1 = arith.truncf %0 : vector<16x16xf32> to vector<16x16xbf16>
    %c0_1 = arith.constant 0 : index
    %c0_2 = arith.constant 0 : index
    %2 = vector.load %arg3[%c0_1, %c0_2] : memref<16x128xbf16, #tpu.memory_space<vmem>>, vector<16x128xbf16>
    %cst = arith.constant dense<0.000000e+00> : vector<16x128xf32>
    %3 = tpu.matmul %1, %2, %cst {dimension_numbers = #tpu.dot_dimension_numbers<[1], [0], [0], [1], [0, 0, 1, 1], [], []>} : vector<16x16xbf16>, vector<16x128xbf16>, vector<16x128xf32> -> vector<16x128xf32>
    %c0_3 = arith.constant 0 : index
    %c0_4 = arith.constant 0 : index
    %4 = vector.load %arg6[%c0_3, %c0_4] : memref<5x128xf32, #tpu.memory_space<vmem>>, vector<1x128xf32>
    %5 = arith.truncf %3 : vector<16x128xf32> to vector<16x128xbf16>
    %6 = arith.truncf %4 : vector<1x128xf32> to vector<1x128xbf16>
    %7 = vector.broadcast %6 : vector<1x128xbf16> to vector<16x128xbf16>
    %8 = arith.addf %5, %7 : vector<16x128xbf16>
    %cst_5 = arith.constant 0.000000e+00 : bf16
    %9 = vector.broadcast %cst_5 : bf16 to vector<16x128xbf16>
    %10 = arith.maximumf %8, %9 : vector<16x128xbf16>
    %c0_6 = arith.constant 0 : index
    %c0_7 = arith.constant 0 : index
    %c0_8 = arith.constant 0 : index
    %11 = vector.load %arg4[%c0_6, %c0_7, %c0_8] : memref<3x128x128xbf16, #tpu.memory_space<vmem>>, vector<1x128x128xbf16>
    %12 = vector.shape_cast %11 : vector<1x128x128xbf16> to vector<128x128xbf16>
    %cst_9 = arith.constant dense<0.000000e+00> : vector<16x128xf32>
    %13 = tpu.matmul %10, %12, %cst_9 {dimension_numbers = #tpu.dot_dimension_numbers<[1], [0], [0], [1], [0, 0, 1, 1], [], []>} : vector<16x128xbf16>, vector<128x128xbf16>, vector<16x128xf32> -> vector<16x128xf32>
    %c1 = arith.constant 1 : index
    %c0_10 = arith.constant 0 : index
    %14 = vector.load %arg6[%c1, %c0_10] : memref<5x128xf32, #tpu.memory_space<vmem>>, vector<1x128xf32>
    %15 = arith.truncf %13 : vector<16x128xf32> to vector<16x128xbf16>
    %16 = arith.truncf %14 : vector<1x128xf32> to vector<1x128xbf16>
    %17 = vector.broadcast %16 : vector<1x128xbf16> to vector<16x128xbf16>
    %18 = arith.addf %15, %17 : vector<16x128xbf16>
    %cst_11 = arith.constant 0.000000e+00 : bf16
    %19 = vector.broadcast %cst_11 : bf16 to vector<16x128xbf16>
    %20 = arith.maximumf %18, %19 : vector<16x128xbf16>
    %c1_12 = arith.constant 1 : index
    %c0_13 = arith.constant 0 : index
    %c0_14 = arith.constant 0 : index
    %21 = vector.load %arg4[%c1_12, %c0_13, %c0_14] : memref<3x128x128xbf16, #tpu.memory_space<vmem>>, vector<1x128x128xbf16>
    %22 = vector.shape_cast %21 : vector<1x128x128xbf16> to vector<128x128xbf16>
    %cst_15 = arith.constant dense<0.000000e+00> : vector<16x128xf32>
    %23 = tpu.matmul %20, %22, %cst_15 {dimension_numbers = #tpu.dot_dimension_numbers<[1], [0], [0], [1], [0, 0, 1, 1], [], []>} : vector<16x128xbf16>, vector<128x128xbf16>, vector<16x128xf32> -> vector<16x128xf32>
    %c2 = arith.constant 2 : index
    %c0_16 = arith.constant 0 : index
    %24 = vector.load %arg6[%c2, %c0_16] : memref<5x128xf32, #tpu.memory_space<vmem>>, vector<1x128xf32>
    %25 = arith.truncf %23 : vector<16x128xf32> to vector<16x128xbf16>
    %26 = arith.truncf %24 : vector<1x128xf32> to vector<1x128xbf16>
    %27 = vector.broadcast %26 : vector<1x128xbf16> to vector<16x128xbf16>
    %28 = arith.addf %25, %27 : vector<16x128xbf16>
    %cst_17 = arith.constant 0.000000e+00 : bf16
    %29 = vector.broadcast %cst_17 : bf16 to vector<16x128xbf16>
    %30 = arith.maximumf %28, %29 : vector<16x128xbf16>
    %c2_18 = arith.constant 2 : index
    %c0_19 = arith.constant 0 : index
    %c0_20 = arith.constant 0 : index
    %31 = vector.load %arg4[%c2_18, %c0_19, %c0_20] : memref<3x128x128xbf16, #tpu.memory_space<vmem>>, vector<1x128x128xbf16>
    %32 = vector.shape_cast %31 : vector<1x128x128xbf16> to vector<128x128xbf16>
    %cst_21 = arith.constant dense<0.000000e+00> : vector<16x128xf32>
    %33 = tpu.matmul %30, %32, %cst_21 {dimension_numbers = #tpu.dot_dimension_numbers<[1], [0], [0], [1], [0, 0, 1, 1], [], []>} : vector<16x128xbf16>, vector<128x128xbf16>, vector<16x128xf32> -> vector<16x128xf32>
    %c3 = arith.constant 3 : index
    %c0_22 = arith.constant 0 : index
    %34 = vector.load %arg6[%c3, %c0_22] : memref<5x128xf32, #tpu.memory_space<vmem>>, vector<1x128xf32>
    %35 = arith.truncf %33 : vector<16x128xf32> to vector<16x128xbf16>
    %36 = arith.truncf %34 : vector<1x128xf32> to vector<1x128xbf16>
    %37 = vector.broadcast %36 : vector<1x128xbf16> to vector<16x128xbf16>
    %38 = arith.addf %35, %37 : vector<16x128xbf16>
    %cst_23 = arith.constant 0.000000e+00 : bf16
    %39 = vector.broadcast %cst_23 : bf16 to vector<16x128xbf16>
    %40 = arith.maximumf %38, %39 : vector<16x128xbf16>
    %c0_24 = arith.constant 0 : index
    %c0_25 = arith.constant 0 : index
    %41 = vector.load %arg5[%c0_24, %c0_25] : memref<128x128xbf16, #tpu.memory_space<vmem>>, vector<128x128xbf16>
    %cst_26 = arith.constant dense<0.000000e+00> : vector<16x128xf32>
    %42 = tpu.matmul %40, %41, %cst_26 {dimension_numbers = #tpu.dot_dimension_numbers<[1], [0], [0], [1], [0, 0, 1, 1], [], []>} : vector<16x128xbf16>, vector<128x128xbf16>, vector<16x128xf32> -> vector<16x128xf32>
    %c4 = arith.constant 4 : index
    %c0_27 = arith.constant 0 : index
    %43 = vector.load %arg6[%c4, %c0_27] : memref<5x128xf32, #tpu.memory_space<vmem>>, vector<1x128xf32>
    %44 = vector.broadcast %43 : vector<1x128xf32> to vector<16x128xf32>
    %45 = arith.addf %42, %44 : vector<16x128xf32>
    %c0_28 = arith.constant 0 : index
    %c0_29 = arith.constant 0 : index
    %46 = memref.load %arg1[%c0_28, %c0_29] : memref<1x1xf32, #tpu.memory_space<smem>>
    %47 = math.tanh %45 : vector<16x128xf32>
    %48 = vector.broadcast %46 : f32 to vector<16x128xf32>
    %49 = arith.mulf %48, %47 : vector<16x128xf32>
    %50 = arith.truncf %49 : vector<16x128xf32> to vector<16x128xbf16>
    %c0_30 = arith.constant 0 : index
    %c0_31 = arith.constant 0 : index
    %51 = vector.load %arg7[%c0_30, %c0_31] : memref<16x128xbf16, #tpu.memory_space<vmem>>, vector<16x128xbf16>
    tpu.vector_store %arg7[%c0_30, %c0_31], %50 {strides = array<i32>} : memref<16x128xbf16, #tpu.memory_space<vmem>>, vector<16x128xbf16>,
    return
  }
  func.func @transform_0(%arg0: i32) -> (i32, i32) {
    %c0_i32 = arith.constant 0 : i32
    %c0_i32_0 = arith.constant 0 : i32
    %c0_i32_1 = arith.constant 0 : i32
    return %c0_i32, %c0_i32_0 : i32, i32
  }
  func.func @transform_1(%arg0: i32) -> (i32, i32) {
    %c0_i32 = arith.constant 0 : i32
    %c0_i32_0 = arith.constant 0 : i32
    return %arg0, %c0_i32 : i32, i32
  }
  func.func @transform_2(%arg0: i32) -> (i32, i32) {
    %c0_i32 = arith.constant 0 : i32
    %c0_i32_0 = arith.constant 0 : i32
    %c0_i32_1 = arith.constant 0 : i32
    return %c0_i32, %c0_i32_0 : i32, i32
  }
  func.func @transform_3(%arg0: i32) -> (i32, i32, i32) {
    %c0_i32 = arith.constant 0 : i32
    %c0_i32_0 = arith.constant 0 : i32
    %c0_i32_1 = arith.constant 0 : i32
    %c0_i32_2 = arith.constant 0 : i32
    return %c0_i32, %c0_i32_0, %c0_i32_1 : i32, i32, i32
  }
  func.func @transform_4(%arg0: i32) -> (i32, i32) {
    %c0_i32 = arith.constant 0 : i32
    %c0_i32_0 = arith.constant 0 : i32
    %c0_i32_1 = arith.constant 0 : i32
    return %c0_i32, %c0_i32_0 : i32, i32
  }
  func.func @transform_5(%arg0: i32) -> (i32, i32) {
    %c0_i32 = arith.constant 0 : i32
    %c0_i32_0 = arith.constant 0 : i32
    %c0_i32_1 = arith.constant 0 : i32
    return %c0_i32, %c0_i32_0 : i32, i32
  }
  func.func @transform_6(%arg0: i32) -> (i32, i32) {
    %c0_i32 = arith.constant 0 : i32
    %c0_i32_0 = arith.constant 0 : i32
    return %arg0, %c0_i32 : i32, i32
  }
}

</mosaic_0001>

<llo_original>
// kernel: tpu_custom_call.1
$region0: #{tpu_custom_call.1}
  #allocation0 [shape = 'u32[]', space=smem, size = 0x4, offset = 0x4, fixed_abs, tag = 'smem constant byte address 0x4 - core index']
  #allocation1 [shape = 'u32[144,128]{1,0:T(1,128)}', space=vmem, size = 0x12000, scoped, tag = 'internal scratch']
  #allocation2 [shape = 'f32[1,1]{1,0:T(1,128)S(6)}', space=smem, size = 0x200, scoped, tag = 'scoped memory for tpu_custom_call.1']
  %s0 = inlined_call_operand.<no memory space> [shape: f32[1,1], index: 0, kind: input, shape index: {}]
  %s1 = inlined_call_operand.hbm [shape: f32[16,16], index: 1, kind: input, shape index: {}]
  %s2 = inlined_call_operand.hbm [shape: bf16[16,128], index: 2, kind: input, shape index: {}]
  %s3 = inlined_call_operand.hbm [shape: bf16[3,128,128], index: 3, kind: input, shape index: {}]
  %s4 = inlined_call_operand.hbm [shape: bf16[128,128], index: 4, kind: input, shape index: {}]
  %s5 = inlined_call_operand.vmem [shape: f32[5,128], index: 5, kind: input, shape index: {}]
  %s6 = inlined_call_operand.hbm [shape: bf16[16,128], index: 6, kind: output, shape index: {}]
  %s7 = sld [smem:[#allocation0]]
  $region50: #{tpu_custom_call.1} parent=0
    _
  %s9 = ssub.s32 1, %s7
  %s10 = scalar_select 0, %s9, %s7
  %11 = sst [smem:[#allocation2]] %s0
  $region1: #{tpu_custom_call.1} parent=0
    #allocation3 [shape = 'u8[8192]{0}', space=vmem, size = 0x2000, scoped, tag = 'input window, operand 1, single buffered']
    #allocation4 [shape = 's32[1]{0}', space=sflag, size = 0x4, scoped, tag = 'scoped memory for tpu_custom_call.1']
    #allocation5 [shape = 's32[1]{0}', space=sflag, size = 0x4, scoped, tag = 'scoped memory for tpu_custom_call.1']
    #allocation6 [shape = 'u8[4096]{0}', space=vmem, size = 0x1000, scoped, tag = 'input window, operand 2, single buffered']
    #allocation7 [shape = 's32[1]{0}', space=sflag, size = 0x4, scoped, tag = 'scoped memory for tpu_custom_call.1']
    #allocation8 [shape = 'u8[98304]{0}', space=vmem, size = 0x18000, scoped, tag = 'input window, operand 3, single buffered']
    #allocation9 [shape = 'u8[32768]{0}', space=vmem, size = 0x8000, scoped, tag = 'input window, operand 4, single buffered']
    #allocation10 [shape = 's32[1]{0}', space=sflag, size = 0x4, scoped, tag = 'scoped memory for tpu_custom_call.1']
    #allocation11 [shape = 'u8[4096]{0}', space=vmem, size = 0x1000, scoped, tag = 'output window, operand 0, single buffered']
    %12 = vsyncpa [#allocation4], 0
    %13 = vsyncpa [#allocation7], 0
    %14 = vsyncpa [#allocation10], 0
    %15 = vsyncpa [#allocation5], 0
    // Predicated region
    $region2: #{tpu_custom_call.1} parent=1 // pred_check
      _
    $region3: #{tpu_custom_call.1} parent=1 // pred_check_branch
      %17 = sbr.rel (0) target = $region5
    $region4: #{tpu_custom_call.1} parent=1 // pred_region
      _
    $region5: #{tpu_custom_call.1} parent=1 // pred_fallthru
      _
    // Predicated region
    $region6: #{tpu_custom_call.1} parent=1 // pred_check
      _
    $region7: #{tpu_custom_call.1} parent=1 // pred_check_branch
      %19 = sbr.rel (0) target = $region9
    $region8: #{tpu_custom_call.1} parent=1 // pred_region
      %s21 = ssub.s32 256, 256
      %22 = vsyncadd [#allocation4], %s21
      %s23 = sshll.u32 [#allocation3], 4
      %s24 = int_to_ptr.vmem [resolvable:$true] %s23
      %29 = dma.hbm_to_vmem [thread:$0]  %s1, 256, %s24, [#allocation4], 128, 128, 8
    $region9: #{tpu_custom_call.1} parent=1 // pred_fallthru
      _
    // Predicated region
    $region10: #{tpu_custom_call.1} parent=1 // pred_check
      _
    $region11: #{tpu_custom_call.1} parent=1 // pred_check_branch
      %31 = sbr.rel (0) target = $region13
    $region12: #{tpu_custom_call.1} parent=1 // pred_region
      %s33 = ssub.s32 128, 128
      %34 = vsyncadd [#allocation7], %s33
      %s35 = sshll.u32 [#allocation6], 4
      %s36 = int_to_ptr.vmem [resolvable:$true] %s35
      %41 = dma.hbm_to_vmem [thread:$0]  %s2, 128, %s36, [#allocation7], 64, 64, 4
    $region13: #{tpu_custom_call.1} parent=1 // pred_fallthru
      _
    // Predicated region
    $region14: #{tpu_custom_call.1} parent=1 // pred_check
      _
    $region15: #{tpu_custom_call.1} parent=1 // pred_check_branch
      %43 = sbr.rel (0) target = $region17
    $region16: #{tpu_custom_call.1} parent=1 // pred_region
      %s45 = ssub.s32 3072, 3072
      %46 = vsyncadd [#allocation7], %s45
      %s47 = sshll.u32 [#allocation8], 4
      %s48 = int_to_ptr.vmem [resolvable:$true] %s47
      %53 = dma.hbm_to_vmem [thread:$0]  %s3, 3072, %s48, [#allocation7], 64, 64, 4
    $region17: #{tpu_custom_call.1} parent=1 // pred_fallthru
      _
    // Predicated region
    $region18: #{tpu_custom_call.1} parent=1 // pred_check
      _
    $region19: #{tpu_custom_call.1} parent=1 // pred_check_branch
      %55 = sbr.rel (0) target = $region21
    $region20: #{tpu_custom_call.1} parent=1 // pred_region
      %s57 = ssub.s32 1024, 1024
      %58 = vsyncadd [#allocation10], %s57
      %s59 = sshll.u32 [#allocation9], 4
      %s60 = int_to_ptr.vmem [resolvable:$true] %s59
      %65 = dma.hbm_to_vmem [thread:$0]  %s4, 1024, %s60, [#allocation10], 64, 64, 4
    $region21: #{tpu_custom_call.1} parent=1 // pred_fallthru
      _
    // Predicated region
    $region22: #{tpu_custom_call.1} parent=1 // pred_check
      _
    $region23: #{tpu_custom_call.1} parent=1 // pred_check_branch
      %67 = sbr.rel (0) target = $region25
    $region24: #{tpu_custom_call.1} parent=1 // pred_region
      _
    $region25: #{tpu_custom_call.1} parent=1 // pred_fallthru
      _
    // Predicated region
    $region26: #{tpu_custom_call.1} parent=1 // pred_check
      _
    $region27: #{tpu_custom_call.1} parent=1 // pred_check_branch
      %69 = sbr.rel (0) target = $region29
    $region28: #{tpu_custom_call.1} parent=1 // pred_region
      %70 = dma.done [#allocation4], 256
    $region29: #{tpu_custom_call.1} parent=1 // pred_fallthru
      _
    // Predicated region
    $region30: #{tpu_custom_call.1} parent=1 // pred_check
      _
    $region31: #{tpu_custom_call.1} parent=1 // pred_check_branch
      %72 = sbr.rel (0) target = $region33
    $region32: #{tpu_custom_call.1} parent=1 // pred_region
      %73 = dma.done [#allocation7], 128
    $region33: #{tpu_custom_call.1} parent=1 // pred_fallthru
      _
    // Predicated region
    $region34: #{tpu_custom_call.1} parent=1 // pred_check
      _
    $region35: #{tpu_custom_call.1} parent=1 // pred_check_branch
      %75 = sbr.rel (0) target = $region37
    $region36: #{tpu_custom_call.1} parent=1 // pred_region
      %76 = dma.done [#allocation7], 3072
    $region37: #{tpu_custom_call.1} parent=1 // pred_fallthru
      _
    // Predicated region
    $region38: #{tpu_custom_call.1} parent=1 // pred_check
      _
    $region39: #{tpu_custom_call.1} parent=1 // pred_check_branch
      %78 = sbr.rel (0) target = $region41
    $region40: #{tpu_custom_call.1} parent=1 // pred_region
      %79 = dma.done [#allocation10], 1024
    $region41: #{tpu_custom_call.1} parent=1 // pred_fallthru
      _
    %v81 = vld [vmem:[#allocation3] sm:$0xff]
    %v82 = vld [vmem:[#allocation3 + $0x8] sm:$0xff]
    %v83 = vpack.c.bf16 %v82, %v81
    %v84 = vld [vmem:[#allocation6] sm:$0xf]
    %v85 = vld [vmem:[#allocation6 + $0x4] sm:$0xf]
    %v88 = vunpack.c.l.b16 %v84
    %v89 = vunpack.c.l.b16 %v85
    %v90 = vpack.c.b16 %v89, %v88
    %vm92 = vcmask 130048
    %v94 = vsel %vm92, %v83, 0
    %96 = vmatprep.subr.bf16.mxu0 0
    %97 = vmatpush1.bf16.msra.mxu0 %v90
    %98 = vmatprep.subr.bf16.mxu0 0
    %99 = vmatpush1.bf16.msra.mxu0 0
    %100 = vmatprep.subr.bf16.mxu0 0
    %101 = vmatpush1.bf16.msra.mxu0 0
    %102 = vmatprep.subr.bf16.mxu0 0
    %103 = vmatpush1.bf16.msra.mxu0 0
    %104 = vmatprep.subr.bf16.mxu0 0
    %105 = vmatpush1.bf16.msra.mxu0 0
    %106 = vmatprep.subr.bf16.mxu0 0
    %107 = vmatpush1.bf16.msra.mxu0 0
    %108 = vmatprep.subr.bf16.mxu0 0
    %109 = vmatpush1.bf16.msra.mxu0 0
    %110 = vmatprep.subr.bf16.mxu0 0
    %111 = vmatpush1.bf16.msra.mxu0 0
    %112 = vmatprep.subr.bf16.mxu0 0
    %113 = vmatpush1.bf16.msra.mxu0 0
    %114 = vmatprep.subr.bf16.mxu0 0
    %115 = vmatpush1.bf16.msra.mxu0 0
    %116 = vmatprep.subr.bf16.mxu0 0
    %117 = vmatpush1.bf16.msra.mxu0 0
    %118 = vmatprep.subr.bf16.mxu0 0
    %119 = vmatpush1.bf16.msra.mxu0 0
    %120 = vmatprep.subr.bf16.mxu0 0
    %121 = vmatpush1.bf16.msra.mxu0 0
    %122 = vmatprep.subr.bf16.mxu0 0
    %123 = vmatpush1.bf16.msra.mxu0 0
    %124 = vmatprep.subr.bf16.mxu0 0
    %125 = vmatpush1.bf16.msra.mxu0 0
    %126 = vmatprep.subr.bf16.mxu0 0
    %127 = vmatpush1.bf16.msra.mxu0 0
    %128 = vmatprep.mubr.bf16.mxu0 0
    %129 = vmatmul.mubr.bf16.gmra.mrb[0].mxu0 %v94
    %v130 = vpop.f32.mrb[0].mxu0
    %v131 = vadd.f32 0.0, %v130
    %v132 = vpop.f32.mrb[0].mxu0
    %v133 = vpop.f32.mrb[0].mxu0
    %v134 = vadd.f32 0.0, %v133
    %v135 = vpop.f32.mrb[0].mxu0
    %136 = vdwg.mxu0
    %v137 = vld [vmem:[%s5] sm:$0x1]
    %v138 = vpack.c.bf16 %v134, %v131
    %v139 = vpack.c.bf16 %v137, %v137
    %v141 = vpack.i.b16 %v139, %v139
    %v143 = vlaneseq
    %v144 = vshrl.u32 %v143, 7
    %v145 = vsub.s32 0, %v144
    %v146 = vrot.slane %v141, %v145
    %v147 = vadd.bf16 %v138, %v146
    %v148 = vmax.bf16 %v147, 0
    %v149 = vld [vmem:[#allocation8] sm:$0xf]
    %v150 = vld [vmem:[#allocation8 + $0x4] sm:$0xf]
    %v151 = vld [vmem:[#allocation8 + $0x8] sm:$0xf]
    %v152 = vld [vmem:[#allocation8 + $0xc] sm:$0xf]
    %v153 = vld [vmem:[#allocation8 + $0x10] sm:$0xf]
    %v154 = vld [vmem:[#allocation8 + $0x14] sm:$0xf]
    %v155 = vld [vmem:[#allocation8 + $0x18] sm:$0xf]
    %v156 = vld [vmem:[#allocation8 + $0x1c] sm:$0xf]
    %v157 = vld [vmem:[#allocation8 + $0x20] sm:$0xf]
    %v158 = vld [vmem:[#allocation8 + $0x24] sm:$0xf]
    %v159 = vld [vmem:[#allocation8 + $0x28] sm:$0xf]
    %v160 = vld [vmem:[#allocation8 + $0x2c] sm:$0xf]
    %v161 = vld [vmem:[#allocation8 + $0x30] sm:$0xf]
    %v162 = vld [vmem:[#allocation8 + $0x34] sm:$0xf]
    %v163 = vld [vmem:[#allocation8 + $0x38] sm:$0xf]
    %v164 = vld [vmem:[#allocation8 + $0x3c] sm:$0xf]
    %v181 = vunpack.c.l.b16 %v149
    %v182 = vunpack.c.l.b16 %v150
    %v183 = vunpack.c.l.b16 %v151
    %v184 = vunpack.c.l.b16 %v152
    %v185 = vunpack.c.l.b16 %v153
    %v186 = vunpack.c.l.b16 %v154
    %v187 = vunpack.c.l.b16 %v155
    %v188 = vunpack.c.l.b16 %v156
    %v189 = vunpack.c.l.b16 %v157
    %v190 = vunpack.c.l.b16 %v158
    %v191 = vunpack.c.l.b16 %v159
    %v192 = vunpack.c.l.b16 %v160
    %v193 = vunpack.c.l.b16 %v161
    %v194 = vunpack.c.l.b16 %v162
    %v195 = vunpack.c.l.b16 %v163
    %v196 = vunpack.c.l.b16 %v164
    %v197 = vpack.c.b16 %v182, %v181
    %v198 = vpack.c.b16 %v184, %v183
    %v199 = vpack.c.b16 %v186, %v185
    %v200 = vpack.c.b16 %v188, %v187
    %v201 = vpack.c.b16 %v190, %v189
    %v202 = vpack.c.b16 %v192, %v191
    %v203 = vpack.c.b16 %v194, %v193
    %v204 = vpack.c.b16 %v196, %v195
    %213 = vmatprep.subr.bf16.mxu0 0
    %214 = vmatpush1.bf16.msra.mxu0 %v197
    %215 = vmatprep.subr.bf16.mxu0 0
    %216 = vmatpush1.bf16.msra.mxu0 %v198
    %217 = vmatprep.subr.bf16.mxu0 0
    %218 = vmatpush1.bf16.msra.mxu0 %v199
    %219 = vmatprep.subr.bf16.mxu0 0
    %220 = vmatpush1.bf16.msra.mxu0 %v200
    %221 = vmatprep.subr.bf16.mxu0 0
    %222 = vmatpush1.bf16.msra.mxu0 %v201
    %223 = vmatprep.subr.bf16.mxu0 0
    %224 = vmatpush1.bf16.msra.mxu0 %v202
    %225 = vmatprep.subr.bf16.mxu0 0
    %226 = vmatpush1.bf16.msra.mxu0 %v203
    %227 = vmatprep.subr.bf16.mxu0 0
    %228 = vmatpush1.bf16.msra.mxu0 %v204
    %229 = vmatprep.subr.bf16.mxu0 0
    %230 = vmatpush1.bf16.msra.mxu0 0
    %231 = vmatprep.subr.bf16.mxu0 0
    %232 = vmatpush1.bf16.msra.mxu0 0
    %233 = vmatprep.subr.bf16.mxu0 0
    %234 = vmatpush1.bf16.msra.mxu0 0
    %235 = vmatprep.subr.bf16.mxu0 0
    %236 = vmatpush1.bf16.msra.mxu0 0
    %237 = vmatprep.subr.bf16.mxu0 0
    %238 = vmatpush1.bf16.msra.mxu0 0
    %239 = vmatprep.subr.bf16.mxu0 0
    %240 = vmatpush1.bf16.msra.mxu0 0
    %241 = vmatprep.subr.bf16.mxu0 0
    %242 = vmatpush1.bf16.msra.mxu0 0
    %243 = vmatprep.subr.bf16.mxu0 0
    %244 = vmatpush1.bf16.msra.mxu0 0
    %245 = vmatprep.mubr.bf16.mxu0 0
    %246 = vmatmul.mubr.bf16.gmra.mrb[0].mxu0 %v148
    %v247 = vpop.f32.mrb[0].mxu0
    %v248 = vadd.f32 0.0, %v247
    %v249 = vpop.f32.mrb[0].mxu0
    %v250 = vpop.f32.mrb[0].mxu0
    %v251 = vadd.f32 0.0, %v250
    %v252 = vpop.f32.mrb[0].mxu0
    %253 = vdwg.mxu0
    %v254 = vld [vmem:[%s5 + $0x1] sm:$0x1]
    %v255 = vpack.c.bf16 %v251, %v248
    %v256 = vpack.c.bf16 %v254, %v254
    %v258 = vpack.i.b16 %v256, %v256
    %v260 = vlaneseq
    %v261 = vshrl.u32 %v260, 7
    %v262 = vsub.s32 0, %v261
    %v263 = vrot.slane %v258, %v262
    %v264 = vadd.bf16 %v255, %v263
    %v265 = vmax.bf16 %v264, 0
    %s266 = scalar_lea.vmem [#allocation8], 64
    %v267 = vld [vmem:[%s266] sm:$0xf]
    %v268 = vld [vmem:[%s266 + $0x4] sm:$0xf]
    %v269 = vld [vmem:[%s266 + $0x8] sm:$0xf]
    %v270 = vld [vmem:[%s266 + $0xc] sm:$0xf]
    %v271 = vld [vmem:[%s266 + $0x10] sm:$0xf]
    %v272 = vld [vmem:[%s266 + $0x14] sm:$0xf]
    %v273 = vld [vmem:[%s266 + $0x18] sm:$0xf]
    %v274 = vld [vmem:[%s266 + $0x1c] sm:$0xf]
    %v275 = vld [vmem:[%s266 + $0x20] sm:$0xf]
    %v276 = vld [vmem:[%s266 + $0x24] sm:$0xf]
    %v277 = vld [vmem:[%s266 + $0x28] sm:$0xf]
    %v278 = vld [vmem:[%s266 + $0x2c] sm:$0xf]
    %v279 = vld [vmem:[%s266 + $0x30] sm:$0xf]
    %v280 = vld [vmem:[%s266 + $0x34] sm:$0xf]
    %v281 = vld [vmem:[%s266 + $0x38] sm:$0xf]
    %v282 = vld [vmem:[%s266 + $0x3c] sm:$0xf]
    %v299 = vunpack.c.l.b16 %v267
    %v300 = vunpack.c.l.b16 %v268
    %v301 = vunpack.c.l.b16 %v269
    %v302 = vunpack.c.l.b16 %v270
    %v303 = vunpack.c.l.b16 %v271
    %v304 = vunpack.c.l.b16 %v272
    %v305 = vunpack.c.l.b16 %v273
    %v306 = vunpack.c.l.b16 %v274
    %v307 = vunpack.c.l.b16 %v275
    %v308 = vunpack.c.l.b16 %v276
    %v309 = vunpack.c.l.b16 %v277
    %v310 = vunpack.c.l.b16 %v278
    %v311 = vunpack.c.l.b16 %v279
    %v312 = vunpack.c.l.b16 %v280
    %v313 = vunpack.c.l.b16 %v281
    %v314 = vunpack.c.l.b16 %v282
    %v315 = vpack.c.b16 %v300, %v299
    %v316 = vpack.c.b16 %v302, %v301
    %v317 = vpack.c.b16 %v304, %v303
    %v318 = vpack.c.b16 %v306, %v305
    %v319 = vpack.c.b16 %v308, %v307
    %v320 = vpack.c.b16 %v310, %v309
    %v321 = vpack.c.b16 %v312, %v311
    %v322 = vpack.c.b16 %v314, %v313
    %331 = vmatprep.subr.bf16.mxu0 0
    %332 = vmatpush1.bf16.msra.mxu0 %v315
    %333 = vmatprep.subr.bf16.mxu0 0
    %334 = vmatpush1.bf16.msra.mxu0 %v316
    %335 = vmatprep.subr.bf16.mxu0 0
    %336 = vmatpush1.bf16.msra.mxu0 %v317
    %337 = vmatprep.subr.bf16.mxu0 0
    %338 = vmatpush1.bf16.msra.mxu0 %v318
    %339 = vmatprep.subr.bf16.mxu0 0
    %340 = vmatpush1.bf16.msra.mxu0 %v319
    %341 = vmatprep.subr.bf16.mxu0 0
    %342 = vmatpush1.bf16.msra.mxu0 %v320
    %343 = vmatprep.subr.bf16.mxu0 0
    %344 = vmatpush1.bf16.msra.mxu0 %v321
    %345 = vmatprep.subr.bf16.mxu0 0
    %346 = vmatpush1.bf16.msra.mxu0 %v322
    %347 = vmatprep.subr.bf16.mxu0 0
    %348 = vmatpush1.bf16.msra.mxu0 0
    %349 = vmatprep.subr.bf16.mxu0 0
    %350 = vmatpush1.bf16.msra.mxu0 0
    %351 = vmatprep.subr.bf16.mxu0 0
    %352 = vmatpush1.bf16.msra.mxu0 0
    %353 = vmatprep.subr.bf16.mxu0 0
    %354 = vmatpush1.bf16.msra.mxu0 0
    %355 = vmatprep.subr.bf16.mxu0 0
    %356 = vmatpush1.bf16.msra.mxu0 0
    %357 = vmatprep.subr.bf16.mxu0 0
    %358 = vmatpush1.bf16.msra.mxu0 0
    %359 = vmatprep.subr.bf16.mxu0 0
    %360 = vmatpush1.bf16.msra.mxu0 0
    %361 = vmatprep.subr.bf16.mxu0 0
    %362 = vmatpush1.bf16.msra.mxu0 0
    %363 = vmatprep.mubr.bf16.mxu0 0
    %364 = vmatmul.mubr.bf16.gmra.mrb[0].mxu0 %v265
    %v365 = vpop.f32.mrb[0].mxu0
    %v366 = vadd.f32 0.0, %v365
    %v367 = vpop.f32.mrb[0].mxu0
    %v368 = vpop.f32.mrb[0].mxu0
    %v369 = vadd.f32 0.0, %v368
    %v370 = vpop.f32.mrb[0].mxu0
    %371 = vdwg.mxu0
    %v372 = vld [vmem:[%s5 + $0x2] sm:$0x1]
    %v373 = vpack.c.bf16 %v369, %v366
    %v374 = vpack.c.bf16 %v372, %v372
    %v376 = vpack.i.b16 %v374, %v374
    %v378 = vlaneseq
    %v379 = vshrl.u32 %v378, 7
    %v380 = vsub.s32 0, %v379
    %v381 = vrot.slane %v376, %v380
    %v382 = vadd.bf16 %v373, %v381
    %v383 = vmax.bf16 %v382, 0
    %s384 = scalar_lea.vmem [#allocation8], 128
    %v385 = vld [vmem:[%s384] sm:$0xf]
    %v386 = vld [vmem:[%s384 + $0x4] sm:$0xf]
    %v387 = vld [vmem:[%s384 + $0x8] sm:$0xf]
    %v388 = vld [vmem:[%s384 + $0xc] sm:$0xf]
    %v389 = vld [vmem:[%s384 + $0x10] sm:$0xf]
    %v390 = vld [vmem:[%s384 + $0x14] sm:$0xf]
    %v391 = vld [vmem:[%s384 + $0x18] sm:$0xf]
    %v392 = vld [vmem:[%s384 + $0x1c] sm:$0xf]
    %v393 = vld [vmem:[%s384 + $0x20] sm:$0xf]
    %v394 = vld [vmem:[%s384 + $0x24] sm:$0xf]
    %v395 = vld [vmem:[%s384 + $0x28] sm:$0xf]
    %v396 = vld [vmem:[%s384 + $0x2c] sm:$0xf]
    %v397 = vld [vmem:[%s384 + $0x30] sm:$0xf]
    %v398 = vld [vmem:[%s384 + $0x34] sm:$0xf]
    %v399 = vld [vmem:[%s384 + $0x38] sm:$0xf]
    %v400 = vld [vmem:[%s384 + $0x3c] sm:$0xf]
    %v417 = vunpack.c.l.b16 %v385
    %v418 = vunpack.c.l.b16 %v386
    %v419 = vunpack.c.l.b16 %v387
    %v420 = vunpack.c.l.b16 %v388
    %v421 = vunpack.c.l.b16 %v389
    %v422 = vunpack.c.l.b16 %v390
    %v423 = vunpack.c.l.b16 %v391
    %v424 = vunpack.c.l.b16 %v392
    %v425 = vunpack.c.l.b16 %v393
    %v426 = vunpack.c.l.b16 %v394
    %v427 = vunpack.c.l.b16 %v395
    %v428 = vunpack.c.l.b16 %v396
    %v429 = vunpack.c.l.b16 %v397
    %v430 = vunpack.c.l.b16 %v398
    %v431 = vunpack.c.l.b16 %v399
    %v432 = vunpack.c.l.b16 %v400
    %v433 = vpack.c.b16 %v418, %v417
    %v434 = vpack.c.b16 %v420, %v419
    %v435 = vpack.c.b16 %v422, %v421
    %v436 = vpack.c.b16 %v424, %v423
    %v437 = vpack.c.b16 %v426, %v425
    %v438 = vpack.c.b16 %v428, %v427
    %v439 = vpack.c.b16 %v430, %v429
    %v440 = vpack.c.b16 %v432, %v431
    %449 = vmatprep.subr.bf16.mxu0 0
    %450 = vmatpush1.bf16.msra.mxu0 %v433
    %451 = vmatprep.subr.bf16.mxu0 0
    %452 = vmatpush1.bf16.msra.mxu0 %v434
    %453 = vmatprep.subr.bf16.mxu0 0
    %454 = vmatpush1.bf16.msra.mxu0 %v435
    %455 = vmatprep.subr.bf16.mxu0 0
    %456 = vmatpush1.bf16.msra.mxu0 %v436
    %457 = vmatprep.subr.bf16.mxu0 0
    %458 = vmatpush1.bf16.msra.mxu0 %v437
    %459 = vmatprep.subr.bf16.mxu0 0
    %460 = vmatpush1.bf16.msra.mxu0 %v438
    %461 = vmatprep.subr.bf16.mxu0 0
    %462 = vmatpush1.bf16.msra.mxu0 %v439
    %463 = vmatprep.subr.bf16.mxu0 0
    %464 = vmatpush1.bf16.msra.mxu0 %v440
    %465 = vmatprep.subr.bf16.mxu0 0
    %466 = vmatpush1.bf16.msra.mxu0 0
    %467 = vmatprep.subr.bf16.mxu0 0
    %468 = vmatpush1.bf16.msra.mxu0 0
    %469 = vmatprep.subr.bf16.mxu0 0
    %470 = vmatpush1.bf16.msra.mxu0 0
    %471 = vmatprep.subr.bf16.mxu0 0
    %472 = vmatpush1.bf16.msra.mxu0 0
    %473 = vmatprep.subr.bf16.mxu0 0
    %474 = vmatpush1.bf16.msra.mxu0 0
    %475 = vmatprep.subr.bf16.mxu0 0
    %476 = vmatpush1.bf16.msra.mxu0 0
    %477 = vmatprep.subr.bf16.mxu0 0
    %478 = vmatpush1.bf16.msra.mxu0 0
    %479 = vmatprep.subr.bf16.mxu0 0
    %480 = vmatpush1.bf16.msra.mxu0 0
    %481 = vmatprep.mubr.bf16.mxu0 0
    %482 = vmatmul.mubr.bf16.gmra.mrb[0].mxu0 %v383
    %v483 = vpop.f32.mrb[0].mxu0
    %v484 = vadd.f32 0.0, %v483
    %v485 = vpop.f32.mrb[0].mxu0
    %v486 = vpop.f32.mrb[0].mxu0
    %v487 = vadd.f32 0.0, %v486
    %v488 = vpop.f32.mrb[0].mxu0
    %489 = vdwg.mxu0
    %v490 = vld [vmem:[%s5 + $0x3] sm:$0x1]
    %v491 = vpack.c.bf16 %v487, %v484
    %v492 = vpack.c.bf16 %v490, %v490
    %v494 = vpack.i.b16 %v492, %v492
    %v496 = vlaneseq
    %v497 = vshrl.u32 %v496, 7
    %v498 = vsub.s32 0, %v497
    %v499 = vrot.slane %v494, %v498
    %v500 = vadd.bf16 %v491, %v499
    %v501 = vmax.bf16 %v500, 0
    %v502 = vld [vmem:[#allocation9] sm:$0xf]
    %v503 = vld [vmem:[#allocation9 + $0x4] sm:$0xf]
    %v504 = vld [vmem:[#allocation9 + $0x8] sm:$0xf]
    %v505 = vld [vmem:[#allocation9 + $0xc] sm:$0xf]
    %v506 = vld [vmem:[#allocation9 + $0x10] sm:$0xf]
    %v507 = vld [vmem:[#allocation9 + $0x14] sm:$0xf]
    %v508 = vld [vmem:[#allocation9 + $0x18] sm:$0xf]
    %v509 = vld [vmem:[#allocation9 + $0x1c] sm:$0xf]
    %v510 = vld [vmem:[#allocation9 + $0x20] sm:$0xf]
    %v511 = vld [vmem:[#allocation9 + $0x24] sm:$0xf]
    %v512 = vld [vmem:[#allocation9 + $0x28] sm:$0xf]
    %v513 = vld [vmem:[#allocation9 + $0x2c] sm:$0xf]
    %v514 = vld [vmem:[#allocation9 + $0x30] sm:$0xf]
    %v515 = vld [vmem:[#allocation9 + $0x34] sm:$0xf]
    %v516 = vld [vmem:[#allocation9 + $0x38] sm:$0xf]
    %v517 = vld [vmem:[#allocation9 + $0x3c] sm:$0xf]
    %v518 = vld [vmem:[%s5 + $0x4] sm:$0x1]
    %v519 = vlaneseq
    %v520 = vshrl.u32 %v519, 7
    %v521 = vsub.s32 0, %v520
    %v522 = vrot.slane %v518, %v521
    %v539 = vunpack.c.l.b16 %v502
    %v540 = vunpack.c.l.b16 %v503
    %v541 = vunpack.c.l.b16 %v504
    %v542 = vunpack.c.l.b16 %v505
    %v543 = vunpack.c.l.b16 %v506
    %v544 = vunpack.c.l.b16 %v507
    %v545 = vunpack.c.l.b16 %v508
    %v546 = vunpack.c.l.b16 %v509
    %v547 = vunpack.c.l.b16 %v510
    %v548 = vunpack.c.l.b16 %v511
    %v549 = vunpack.c.l.b16 %v512
    %v550 = vunpack.c.l.b16 %v513
    %v551 = vunpack.c.l.b16 %v514
    %v552 = vunpack.c.l.b16 %v515
    %v553 = vunpack.c.l.b16 %v516
    %v554 = vunpack.c.l.b16 %v517
    %v555 = vpack.c.b16 %v540, %v539
    %v556 = vpack.c.b16 %v542, %v541
    %v557 = vpack.c.b16 %v544, %v543
    %v558 = vpack.c.b16 %v546, %v545
    %v559 = vpack.c.b16 %v548, %v547
    %v560 = vpack.c.b16 %v550, %v549
    %v561 = vpack.c.b16 %v552, %v551
    %v562 = vpack.c.b16 %v554, %v553
    %571 = vmatprep.subr.bf16.mxu0 0
    %572 = vmatpush1.bf16.msra.mxu0 %v555
    %573 = vmatprep.subr.bf16.mxu0 0
    %574 = vmatpush1.bf16.msra.mxu0 %v556
    %575 = vmatprep.subr.bf16.mxu0 0
    %576 = vmatpush1.bf16.msra.mxu0 %v557
    %577 = vmatprep.subr.bf16.mxu0 0
    %578 = vmatpush1.bf16.msra.mxu0 %v558
    %579 = vmatprep.subr.bf16.mxu0 0
    %580 = vmatpush1.bf16.msra.mxu0 %v559
    %581 = vmatprep.subr.bf16.mxu0 0
    %582 = vmatpush1.bf16.msra.mxu0 %v560
    %583 = vmatprep.subr.bf16.mxu0 0
    %584 = vmatpush1.bf16.msra.mxu0 %v561
    %585 = vmatprep.subr.bf16.mxu0 0
    %586 = vmatpush1.bf16.msra.mxu0 %v562
    %587 = vmatprep.subr.bf16.mxu0 0
    %588 = vmatpush1.bf16.msra.mxu0 0
    %589 = vmatprep.subr.bf16.mxu0 0
    %590 = vmatpush1.bf16.msra.mxu0 0
    %591 = vmatprep.subr.bf16.mxu0 0
    %592 = vmatpush1.bf16.msra.mxu0 0
    %593 = vmatprep.subr.bf16.mxu0 0
    %594 = vmatpush1.bf16.msra.mxu0 0
    %595 = vmatprep.subr.bf16.mxu0 0
    %596 = vmatpush1.bf16.msra.mxu0 0
    %597 = vmatprep.subr.bf16.mxu0 0
    %598 = vmatpush1.bf16.msra.mxu0 0
    %599 = vmatprep.subr.bf16.mxu0 0
    %600 = vmatpush1.bf16.msra.mxu0 0
    %601 = vmatprep.subr.bf16.mxu0 0
    %602 = vmatpush1.bf16.msra.mxu0 0
    %603 = vmatprep.mubr.bf16.mxu0 0
    %604 = vmatmul.mubr.bf16.gmra.mrb[0].mxu0 %v501
    %v605 = vpop.f32.mrb[0].mxu0
    %v606 = vadd.f32 %v522, %v605
    %v607 = vpop.f32.mrb[0].mxu0
    %v608 = vpop.f32.mrb[0].mxu0
    %v609 = vadd.f32 %v522, %v608
    %v610 = vpop.f32.mrb[0].mxu0
    %611 = vdwg.mxu0
    %s612 = sld [smem:[#allocation2]]
    %v613 = vtanh.pop %v606
    %v614 = vtanh.pop %v609
    %v615 = vstv %s612
    %v616 = vmul.f32 %v615, %v613
    %v617 = vmul.f32 %v615, %v614
    %v618 = vpack.c.bf16 %v617, %v616
    %v620 = vunpack.c.l.b16 %v618
    %v621 = vunpack.c.h.b16 %v618
    %v622 = vpack.c.b16 %v620, %v620
    %v623 = vpack.c.b16 %v621, %v621
    %626 = vst [vmem:[#allocation11] sm:$0xf] %v622
    %627 = vst [vmem:[#allocation11 + $0x4] sm:$0xf] %v623
    // Predicated region
    $region42: #{tpu_custom_call.1} parent=1 // pred_check
      _
    $region43: #{tpu_custom_call.1} parent=1 // pred_check_branch
      %629 = sbr.rel (0) target = $region45
    $region44: #{tpu_custom_call.1} parent=1 // pred_region
      %s631 = ssub.s32 128, 128
      %632 = vsyncadd [#allocation5], %s631
      %s633 = sshll.u32 [#allocation11], 4
      %s634 = int_to_ptr.vmem [resolvable:$true] %s633
      %639 = dma.vmem_to_hbm [thread:$0]  %s634, 128, %s6, [#allocation5], 64, 64, 4
    $region45: #{tpu_custom_call.1} parent=1 // pred_fallthru
      _
    // Predicated region
    $region46: #{tpu_custom_call.1} parent=1 // pred_check
      _
    $region47: #{tpu_custom_call.1} parent=1 // pred_check_branch
      %641 = sbr.rel (0) target = $region49
    $region48: #{tpu_custom_call.1} parent=1 // pred_region
      %642 = dma.done [#allocation5], 128
    $region49: #{tpu_custom_call.1} parent=1 // pred_fallthru
      _
    %643 = vsyncpa [#allocation4], 1
    %644 = vsyncpa [#allocation7], 1
    %645 = vsyncpa [#allocation10], 1
    %646 = vsyncpa [#allocation5], 1

</llo_original>
